<compile_context>
chip_gen: v7x
topology: tpu7x:2x2x1
jax: 0.10.0
libtpu: 0.0.40
codegen_flags: <defaults>
</compile_context>

<pallas_src>
import functools

import jax
import jax.numpy as jnp
from jax import lax
from jax.experimental import pallas as pl
from jax.experimental.pallas import tpu as pltpu


def _round_up(x, m):
    return (x + m - 1) // m * m


def _pick_out_tile(out_p):
    # out_p is always a multiple of 128.
    return 256 if out_p % 256 == 0 else 128


def _pick_batch_tile(batch):
    return 256 if batch >= 256 else _round_up(batch, 8)


def _lstm_cell_kernel(x_ref, h_ref, c_ref, wx_ref, wh_ref, b_ref,
                      h_out_ref, c_out_ref, *, to):
    # x: (TB, inp)  h: (TB, out_p)  c: (TB, TO)
    # wx: (inp, 4*TO)  wh: (out_p, 4*TO)  b: (1, 4*TO)   [gate order i,f,g,o]
    dims = (((1,), (0,)), ((), ()))   # natural (TB,K) @ (K,N) on the MXU

    pre = lax.dot_general(x_ref[...], wx_ref[...], dims,
                          preferred_element_type=jnp.float32)
    pre = pre + lax.dot_general(h_ref[...], wh_ref[...], dims,
                                preferred_element_type=jnp.float32)
    pre = pre + b_ref[...].astype(jnp.float32)        # (TB, 4*TO), f32

    def sigmoid(z):
        # 0.5 * (tanh(0.5 z) + 1): EUP transcendental, no VPU divide.
        return 0.5 * jnp.tanh(0.5 * z) + 0.5

    # Lane-aligned gate slices (to is a multiple of 128).  Ordered to keep
    # peak vreg liveness low: i*g first, then f*c + ig, then o*tanh(c').
    ig = sigmoid(pre[:, 0:to]) * jnp.tanh(pre[:, 2 * to:3 * to])
    c_new = sigmoid(pre[:, to:2 * to]) * c_ref[...].astype(jnp.float32) + ig
    c_out_ref[...] = c_new.astype(c_out_ref.dtype)
    h_new = sigmoid(pre[:, 3 * to:4 * to]) * jnp.tanh(c_new)
    h_out_ref[...] = h_new.astype(h_out_ref.dtype)


def prepare_lstm_params(weight, bias, *, param_dtype=jnp.bfloat16):
    """One-time weight prep (do this at init, not per step).

    weight: (4*out, inp+out) PyTorch nn.Linear layout, bias: (4*out,)
    Returns (wx, wh, b):
      wx: (inp,   4*out_p) param_dtype
      wh: (out_p, 4*out_p) param_dtype
      b:  (1,     4*out_p) float32
    with the output axis laid out per-out-tile as [tile][gate][unit] so every
    in-kernel gate slice is lane-aligned.
    """
    four_out, K = weight.shape
    out_size = four_out // 4
    inp_size = K - out_size

    out_p = _round_up(out_size, 128)
    TO = _pick_out_tile(out_p)
    n_tiles = out_p // TO

    w = weight.reshape(4, out_size, K)
    w = jnp.pad(w, ((0, 0), (0, out_p - out_size), (0, 0)))
    w_x = w[:, :, :inp_size]                                   # (4, out_p, inp)
    w_h = w[:, :, inp_size:]                                   # (4, out_p, out)
    w_h = jnp.pad(w_h, ((0, 0), (0, 0), (0, out_p - out_size)))  # (4, out_p, out_p)

    def _rearrange(wk):
        kdim = wk.shape[-1]
        wk = wk.reshape(4, n_tiles, TO, kdim)
        wk = wk.transpose(3, 1, 0, 2)                          # (K, tiles, 4, TO)
        return wk.reshape(kdim, n_tiles * 4 * TO)

    wx = _rearrange(w_x).astype(param_dtype)
    wh = _rearrange(w_h).astype(param_dtype)

    b = bias.reshape(4, out_size)
    b = jnp.pad(b, ((0, 0), (0, out_p - out_size)))
    b = b.reshape(4, n_tiles, TO).transpose(1, 0, 2).reshape(1, n_tiles * 4 * TO)
    b = b.astype(jnp.float32)
    return wx, wh, b


@jax.jit
def lstm_cell_step(x, h, c, wx, wh, br):
    """x: (B, inp), h/c: (B, out); wx/wh/br from prepare_lstm_params."""
    B, inp_size = x.shape
    out_size = h.shape[1]
    out_p = wh.shape[0]
    TO = _pick_out_tile(out_p)
    n_out_tiles = out_p // TO

    TB = _pick_batch_tile(B)
    B_p = _round_up(B, TB)
    n_b_tiles = B_p // TB

    cdt = wx.dtype   # matmul operand dtype (bf16 by default); accum stays f32
    x_p = jnp.pad(x, ((0, B_p - B), (0, 0))).astype(cdt)
    h_p = jnp.pad(h, ((0, B_p - B), (0, out_p - out_size))).astype(cdt)
    # Cell state is carried at its own dtype (f32 in the demo); the update is
    # computed in f32 inside the kernel.
    c_p = jnp.pad(c, ((0, B_p - B), (0, out_p - out_size)))

    kernel = functools.partial(_lstm_cell_kernel, to=TO)

    h_new, c_new = pl.pallas_call(
        kernel,
        grid=(n_out_tiles, n_b_tiles),
        in_specs=[
            pl.BlockSpec((TB, inp_size),   lambda n, bb: (bb, 0)),   # x
            pl.BlockSpec((TB, out_p),      lambda n, bb: (bb, 0)),   # h (full, contracted)
            pl.BlockSpec((TB, TO),         lambda n, bb: (bb, n)),   # c
            pl.BlockSpec((inp_size, 4 * TO), lambda n, bb: (0, n)),  # wx
            pl.BlockSpec((out_p, 4 * TO),  lambda n, bb: (0, n)),    # wh
            pl.BlockSpec((1, 4 * TO),      lambda n, bb: (0, n)),    # bias
        ],
        out_specs=(
            pl.BlockSpec((TB, TO), lambda n, bb: (bb, n)),           # h'
            pl.BlockSpec((TB, TO), lambda n, bb: (bb, n)),           # c'
        ),
        out_shape=(
            jax.ShapeDtypeStruct((B_p, out_p), h.dtype),
            jax.ShapeDtypeStruct((B_p, out_p), c.dtype),
        ),
        compiler_params=pltpu.CompilerParams(
            dimension_semantics=("parallel", "parallel"),
            vmem_limit_bytes=64 * 1024 * 1024),
    )(x_p, h_p, c_p, wx, wh, br)

    return h_new[:B, :out_size], c_new[:B, :out_size]


def lstm_cell(x, h, c, weight, bias, *, param_dtype=jnp.bfloat16):
    """Convenience wrapper: prep + one step (prefer prep outside a time loop)."""
    wx, wh, br = prepare_lstm_params(weight, bias, param_dtype=param_dtype)
    return lstm_cell_step(x, h, c, wx, wh, br)


def _init_linear_params(key, in_features, out_features, dtype=jnp.float32):
    # PyTorch nn.Linear default init: U(-1/sqrt(fan_in), 1/sqrt(fan_in))
    kw, kb = jax.random.split(key)
    bound = 1.0 / (in_features ** 0.5)
    weight = jax.random.uniform(
        kw, (out_features, in_features), dtype, minval=-bound, maxval=bound)
    bias = jax.random.uniform(
        kb, (out_features,), dtype, minval=-bound, maxval=bound)
    return weight, bias


def _reference(x, h, c, weight, bias):
    combined = jnp.concatenate([x, h], axis=1) @ weight.T + bias
    i_r, f_r, g_r, o_r = jnp.split(combined, 4, axis=1)
    i_r = jax.nn.sigmoid(i_r)
    f_r = jax.nn.sigmoid(f_r)
    g_r = jnp.tanh(g_r)
    o_r = jax.nn.sigmoid(o_r)
    c_ref = f_r * c + i_r * g_r
    h_ref = o_r * jnp.tanh(c_ref)
    return h_ref, c_ref


if __name__ == "__main__":
    key = jax.random.PRNGKey(0)

    # --- Test 1: small shapes, f32 params (tight check) + bf16 (loose) ------
    B, inp_size, out_size = 8, 16, 32
    kx, kh, kc, kp = jax.random.split(key, 4)
    x = jax.random.normal(kx, (B, inp_size), jnp.float32)
    h = jax.random.normal(kh, (B, out_size), jnp.float32)
    c = jax.random.normal(kc, (B, out_size), jnp.float32)
    weight, bias = _init_linear_params(kp, inp_size + out_size, 4 * out_size)

    pf32 = prepare_lstm_params(weight, bias, param_dtype=jnp.float32)
    pbf16 = prepare_lstm_params(weight, bias, param_dtype=jnp.bfloat16)
    h32, c32 = lstm_cell_step(x, h, c, *pf32)
    h16, c16 = lstm_cell_step(x, h, c, *pbf16)
    jax.block_until_ready((h32, c32, h16, c16))

    h_ref, c_ref = _reference(x, h, c, weight, bias)
    assert jnp.allclose(h32, h_ref, atol=1e-4, rtol=1e-4), \
        float(jnp.max(jnp.abs(h32 - h_ref)))
    assert jnp.allclose(c32, c_ref, atol=1e-4, rtol=1e-4), \
        float(jnp.max(jnp.abs(c32 - c_ref)))
    assert jnp.allclose(h16, h_ref, atol=3e-2, rtol=3e-2), \
        float(jnp.max(jnp.abs(h16 - h_ref)))
    assert jnp.allclose(c16, c_ref, atol=3e-2, rtol=3e-2), \
        float(jnp.max(jnp.abs(c16 - c_ref)))

    # --- Test 2: odd sizes exercising padding + a multi-tile grid -----------
    B2, inp2, out2 = 16, 40, 300   # out_p=384 -> 3 out tiles of 128
    k2 = jax.random.split(key, 8)
    x2 = jax.random.normal(k2[0], (B2, inp2), jnp.float32)
    h2 = jax.random.normal(k2[1], (B2, out2), jnp.float32)
    c2 = jax.random.normal(k2[2], (B2, out2), jnp.float32)
    w2, b2 = _init_linear_params(k2[3], inp2 + out2, 4 * out2)

    p2 = prepare_lstm_params(w2, b2, param_dtype=jnp.float32)
    h2o, c2o = lstm_cell_step(x2, h2, c2, *p2)
    jax.block_until_ready((h2o, c2o))

    h2_ref, c2_ref = _reference(x2, h2, c2, w2, b2)
    assert jnp.allclose(h2o, h2_ref, atol=1e-4, rtol=1e-4), \
        float(jnp.max(jnp.abs(h2o - h2_ref)))
    assert jnp.allclose(c2o, c2_ref, atol=1e-4, rtol=1e-4), \
        float(jnp.max(jnp.abs(c2o - c2_ref)))

    print("KERNEL_OK")
</pallas_src>

<mosaic_0001>
module attributes {stable_mosaic.version = 11 : i64} {
  func.func @_lstm_cell_kernel(%arg0: i32, %arg1: i32, %arg2: memref<8x16xf32, #tpu.memory_space<vmem>>, %arg3: memref<8x128xf32, #tpu.memory_space<vmem>>, %arg4: memref<8x128xf32, #tpu.memory_space<vmem>>, %arg5: memref<16x512xf32, #tpu.memory_space<vmem>>, %arg6: memref<128x512xf32, #tpu.memory_space<vmem>>, %arg7: memref<1x512xf32, #tpu.memory_space<vmem>>, %arg8: memref<8x128xf32, #tpu.memory_space<vmem>>, %arg9: memref<8x128xf32, #tpu.memory_space<vmem>>) attributes {dimension_semantics = [#tpu.dimension_semantics<parallel>, #tpu.dimension_semantics<parallel>], iteration_bounds = array<i64: 1, 1>, scalar_prefetch = 0 : i64, scratch_operands = 0 : i64, tpu.core_type = #tpu.core_type<tc>, window_params = [{transform_indices = @transform_0, window_bounds = array<i64: 8, 16>}, {transform_indices = @transform_1, window_bounds = array<i64: 8, 128>}, {transform_indices = @transform_2, window_bounds = array<i64: 8, 128>}, {transform_indices = @transform_3, window_bounds = array<i64: 16, 512>}, {transform_indices = @transform_4, window_bounds = array<i64: 128, 512>}, {transform_indices = @transform_5, window_bounds = array<i64: 1, 512>}, {transform_indices = @transform_6, window_bounds = array<i64: 8, 128>}, {transform_indices = @transform_7, window_bounds = array<i64: 8, 128>}]} {
    %c0 = arith.constant 0 : index
    %c0_0 = arith.constant 0 : index
    %0 = vector.load %arg2[%c0, %c0_0] : memref<8x16xf32, #tpu.memory_space<vmem>>, vector<8x16xf32>
    %c0_1 = arith.constant 0 : index
    %c0_2 = arith.constant 0 : index
    %1 = vector.load %arg5[%c0_1, %c0_2] : memref<16x512xf32, #tpu.memory_space<vmem>>, vector<16x512xf32>
    %cst = arith.constant dense<0.000000e+00> : vector<8x512xf32>
    %2 = tpu.matmul %0, %1, %cst {dimension_numbers = #tpu.dot_dimension_numbers<[1], [0], [0], [1], [0, 0, 1, 1], [], []>} : vector<8x16xf32>, vector<16x512xf32>, vector<8x512xf32> -> vector<8x512xf32>
    %c0_3 = arith.constant 0 : index
    %c0_4 = arith.constant 0 : index
    %3 = vector.load %arg3[%c0_3, %c0_4] : memref<8x128xf32, #tpu.memory_space<vmem>>, vector<8x128xf32>
    %c0_5 = arith.constant 0 : index
    %c0_6 = arith.constant 0 : index
    %4 = vector.load %arg6[%c0_5, %c0_6] : memref<128x512xf32, #tpu.memory_space<vmem>>, vector<128x512xf32>
    %cst_7 = arith.constant dense<0.000000e+00> : vector<8x512xf32>
    %5 = tpu.matmul %3, %4, %cst_7 {dimension_numbers = #tpu.dot_dimension_numbers<[1], [0], [0], [1], [0, 0, 1, 1], [], []>} : vector<8x128xf32>, vector<128x512xf32>, vector<8x512xf32> -> vector<8x512xf32>
    %6 = arith.addf %2, %5 : vector<8x512xf32>
    %c0_8 = arith.constant 0 : index
    %c0_9 = arith.constant 0 : index
    %7 = vector.load %arg7[%c0_8, %c0_9] : memref<1x512xf32, #tpu.memory_space<vmem>>, vector<1x512xf32>
    %8 = vector.broadcast %7 : vector<1x512xf32> to vector<8x512xf32>
    %9 = arith.addf %6, %8 : vector<8x512xf32>
    %10 = vector.extract_strided_slice %9 {offsets = [0, 0], sizes = [8, 128], strides = [1, 1]} : vector<8x512xf32> to vector<8x128xf32>
    %cst_10 = arith.constant 5.000000e-01 : f32
    %11 = vector.broadcast %cst_10 : f32 to vector<8x128xf32>
    %12 = arith.mulf %11, %10 : vector<8x128xf32>
    %13 = math.tanh %12 : vector<8x128xf32>
    %cst_11 = arith.constant 5.000000e-01 : f32
    %14 = vector.broadcast %cst_11 : f32 to vector<8x128xf32>
    %15 = arith.mulf %14, %13 : vector<8x128xf32>
    %cst_12 = arith.constant 5.000000e-01 : f32
    %16 = vector.broadcast %cst_12 : f32 to vector<8x128xf32>
    %17 = arith.addf %15, %16 : vector<8x128xf32>
    %18 = vector.extract_strided_slice %9 {offsets = [0, 256], sizes = [8, 128], strides = [1, 1]} : vector<8x512xf32> to vector<8x128xf32>
    %19 = math.tanh %18 : vector<8x128xf32>
    %20 = arith.mulf %17, %19 : vector<8x128xf32>
    %21 = vector.extract_strided_slice %9 {offsets = [0, 128], sizes = [8, 128], strides = [1, 1]} : vector<8x512xf32> to vector<8x128xf32>
    %cst_13 = arith.constant 5.000000e-01 : f32
    %22 = vector.broadcast %cst_13 : f32 to vector<8x128xf32>
    %23 = arith.mulf %22, %21 : vector<8x128xf32>
    %24 = math.tanh %23 : vector<8x128xf32>
    %cst_14 = arith.constant 5.000000e-01 : f32
    %25 = vector.broadcast %cst_14 : f32 to vector<8x128xf32>
    %26 = arith.mulf %25, %24 : vector<8x128xf32>
    %cst_15 = arith.constant 5.000000e-01 : f32
    %27 = vector.broadcast %cst_15 : f32 to vector<8x128xf32>
    %28 = arith.addf %26, %27 : vector<8x128xf32>
    %c0_16 = arith.constant 0 : index
    %c0_17 = arith.constant 0 : index
    %29 = vector.load %arg4[%c0_16, %c0_17] : memref<8x128xf32, #tpu.memory_space<vmem>>, vector<8x128xf32>
    %30 = arith.mulf %28, %29 : vector<8x128xf32>
    %31 = arith.addf %30, %20 : vector<8x128xf32>
    %c0_18 = arith.constant 0 : index
    %c0_19 = arith.constant 0 : index
    %32 = vector.load %arg9[%c0_18, %c0_19] : memref<8x128xf32, #tpu.memory_space<vmem>>, vector<8x128xf32>
    tpu.vector_store %arg9[%c0_18, %c0_19], %31 {strides = array<i32>} : memref<8x128xf32, #tpu.memory_space<vmem>>, vector<8x128xf32>,
    %33 = vector.extract_strided_slice %9 {offsets = [0, 384], sizes = [8, 128], strides = [1, 1]} : vector<8x512xf32> to vector<8x128xf32>
    %cst_20 = arith.constant 5.000000e-01 : f32
    %34 = vector.broadcast %cst_20 : f32 to vector<8x128xf32>
    %35 = arith.mulf %34, %33 : vector<8x128xf32>
    %36 = math.tanh %35 : vector<8x128xf32>
    %cst_21 = arith.constant 5.000000e-01 : f32
    %37 = vector.broadcast %cst_21 : f32 to vector<8x128xf32>
    %38 = arith.mulf %37, %36 : vector<8x128xf32>
    %cst_22 = arith.constant 5.000000e-01 : f32
    %39 = vector.broadcast %cst_22 : f32 to vector<8x128xf32>
    %40 = arith.addf %38, %39 : vector<8x128xf32>
    %41 = math.tanh %31 : vector<8x128xf32>
    %42 = arith.mulf %40, %41 : vector<8x128xf32>
    %c0_23 = arith.constant 0 : index
    %c0_24 = arith.constant 0 : index
    %43 = vector.load %arg8[%c0_23, %c0_24] : memref<8x128xf32, #tpu.memory_space<vmem>>, vector<8x128xf32>
    tpu.vector_store %arg8[%c0_23, %c0_24], %42 {strides = array<i32>} : memref<8x128xf32, #tpu.memory_space<vmem>>, vector<8x128xf32>,
    return
  }
  func.func @transform_0(%arg0: i32, %arg1: i32) -> (i32, i32) {
    %c0_i32 = arith.constant 0 : i32
    %c0_i32_0 = arith.constant 0 : i32
    return %arg1, %c0_i32 : i32, i32
  }
  func.func @transform_1(%arg0: i32, %arg1: i32) -> (i32, i32) {
    %c0_i32 = arith.constant 0 : i32
    %c0_i32_0 = arith.constant 0 : i32
    return %arg1, %c0_i32 : i32, i32
  }
  func.func @transform_2(%arg0: i32, %arg1: i32) -> (i32, i32) {
    %c0_i32 = arith.constant 0 : i32
    return %arg1, %arg0 : i32, i32
  }
  func.func @transform_3(%arg0: i32, %arg1: i32) -> (i32, i32) {
    %c0_i32 = arith.constant 0 : i32
    %c0_i32_0 = arith.constant 0 : i32
    return %c0_i32, %arg0 : i32, i32
  }
  func.func @transform_4(%arg0: i32, %arg1: i32) -> (i32, i32) {
    %c0_i32 = arith.constant 0 : i32
    %c0_i32_0 = arith.constant 0 : i32
    return %c0_i32, %arg0 : i32, i32
  }
  func.func @transform_5(%arg0: i32, %arg1: i32) -> (i32, i32) {
    %c0_i32 = arith.constant 0 : i32
    %c0_i32_0 = arith.constant 0 : i32
    return %c0_i32, %arg0 : i32, i32
  }
  func.func @transform_6(%arg0: i32, %arg1: i32) -> (i32, i32) {
    %c0_i32 = arith.constant 0 : i32
    return %arg1, %arg0 : i32, i32
  }
  func.func @transform_7(%arg0: i32, %arg1: i32) -> (i32, i32) {
    %c0_i32 = arith.constant 0 : i32
    return %arg1, %arg0 : i32, i32
  }
}

</mosaic_0001>

<llo_original>
// kernel: lstm_cell_step.1
$region0: #{lstm_cell_step.1}
  #allocation0 [shape = 'u32[]', space=smem, size = 0x4, offset = 0x4, fixed_abs, tag = 'smem constant byte address 0x4 - core index']
  #allocation1 [shape = 'u32[144,128]{1,0:T(1,128)}', space=vmem, size = 0x12000, scoped, tag = 'internal scratch']
  %s0 = inlined_call_operand.hbm [shape: f32[8,16], index: 0, kind: input, shape index: {}]
  %s1 = inlined_call_operand.hbm [shape: f32[8,128], index: 1, kind: input, shape index: {}]
  %s2 = inlined_call_operand.hbm [shape: f32[8,128], index: 2, kind: input, shape index: {}]
  %s3 = inlined_call_operand.hbm [shape: f32[16,512], index: 3, kind: input, shape index: {}]
  %s4 = inlined_call_operand.hbm [shape: f32[128,512], index: 4, kind: input, shape index: {}]
  %s5 = inlined_call_operand.hbm [shape: f32[1,512], index: 5, kind: input, shape index: {}]
  %s6 = inlined_call_operand.hbm [shape: f32[8,128], index: 6, kind: output, shape index: {0}]
  %s7 = inlined_call_operand.hbm [shape: f32[8,128], index: 7, kind: output, shape index: {1}]
  %8 = xla_tuple %s6, %s7
  %s9 = sld [smem:[#allocation0]]
  $region66: #{lstm_cell_step.1} parent=0
    _
  %s11 = ssub.s32 1, %s9
  %s12 = scalar_select 0, %s11, %s9
  $region1: #{lstm_cell_step.1} parent=0
    #allocation2 [shape = 'u8[4096]{0}', space=vmem, size = 0x1000, scoped, tag = 'input window, operand 0, single buffered']
    #allocation3 [shape = 's32[1]{0}', space=sflag, size = 0x4, scoped, tag = 'scoped memory for lstm_cell_step.1']
    #allocation4 [shape = 's32[1]{0}', space=sflag, size = 0x4, scoped, tag = 'scoped memory for lstm_cell_step.1']
    #allocation5 [shape = 'u8[4096]{0}', space=vmem, size = 0x1000, scoped, tag = 'input window, operand 1, single buffered']
    #allocation6 [shape = 's32[1]{0}', space=sflag, size = 0x4, scoped, tag = 'scoped memory for lstm_cell_step.1']
    #allocation7 [shape = 'u8[4096]{0}', space=vmem, size = 0x1000, scoped, tag = 'input window, operand 2, single buffered']
    #allocation8 [shape = 'u8[32768]{0}', space=vmem, size = 0x8000, scoped, tag = 'input window, operand 3, single buffered']
    #allocation9 [shape = 's32[1]{0}', space=sflag, size = 0x4, scoped, tag = 'scoped memory for lstm_cell_step.1']
    #allocation10 [shape = 'u8[262144]{0}', space=vmem, size = 0x40000, scoped, tag = 'input window, operand 4, single buffered']
    #allocation11 [shape = 'u8[2048]{0}', space=vmem, size = 0x800, scoped, tag = 'input window, operand 5, single buffered']
    #allocation12 [shape = 's32[1]{0}', space=sflag, size = 0x4, scoped, tag = 'scoped memory for lstm_cell_step.1']
    #allocation13 [shape = 'u8[4096]{0}', space=vmem, size = 0x1000, scoped, tag = 'output window, operand 0, single buffered']
    #allocation14 [shape = 'u8[4096]{0}', space=vmem, size = 0x1000, scoped, tag = 'output window, operand 1, single buffered']
    #allocation15 [shape = 's32[1]{0}', space=sflag, size = 0x4, scoped, tag = 'scoped memory for lstm_cell_step.1']
    %13 = vsyncpa [#allocation3], 0
    %14 = vsyncpa [#allocation6], 0
    %15 = vsyncpa [#allocation9], 0
    %16 = vsyncpa [#allocation12], 0
    %17 = vsyncpa [#allocation4], 0
    %18 = vsyncpa [#allocation15], 0
    // Predicated region
    $region2: #{lstm_cell_step.1} parent=1 // pred_check
      _
    $region3: #{lstm_cell_step.1} parent=1 // pred_check_branch
      %20 = sbr.rel (0) target = $region5
    $region4: #{lstm_cell_step.1} parent=1 // pred_region
      %s22 = ssub.s32 128, 128
      %23 = vsyncadd [#allocation3], %s22
      %s25 = sshll.u32 [#allocation2], 4
      %s26 = int_to_ptr.vmem [resolvable:$true] %s25
      %28 = dma.hbm_to_vmem [thread:$0]  %s0, 128, %s26, [#allocation3]
    $region5: #{lstm_cell_step.1} parent=1 // pred_fallthru
      _
    // Predicated region
    $region6: #{lstm_cell_step.1} parent=1 // pred_check
      _
    $region7: #{lstm_cell_step.1} parent=1 // pred_check_branch
      %30 = sbr.rel (0) target = $region9
    $region8: #{lstm_cell_step.1} parent=1 // pred_region
      %s32 = ssub.s32 128, 128
      %33 = vsyncadd [#allocation6], %s32
      %s35 = sshll.u32 [#allocation5], 4
      %s36 = int_to_ptr.vmem [resolvable:$true] %s35
      %38 = dma.hbm_to_vmem [thread:$0]  %s1, 128, %s36, [#allocation6]
    $region9: #{lstm_cell_step.1} parent=1 // pred_fallthru
      _
    // Predicated region
    $region10: #{lstm_cell_step.1} parent=1 // pred_check
      _
    $region11: #{lstm_cell_step.1} parent=1 // pred_check_branch
      %40 = sbr.rel (0) target = $region13
    $region12: #{lstm_cell_step.1} parent=1 // pred_region
      %s42 = ssub.s32 128, 128
      %43 = vsyncadd [#allocation6], %s42
      %s45 = sshll.u32 [#allocation7], 4
      %s46 = int_to_ptr.vmem [resolvable:$true] %s45
      %48 = dma.hbm_to_vmem [thread:$0]  %s2, 128, %s46, [#allocation6]
    $region13: #{lstm_cell_step.1} parent=1 // pred_fallthru
      _
    // Predicated region
    $region14: #{lstm_cell_step.1} parent=1 // pred_check
      _
    $region15: #{lstm_cell_step.1} parent=1 // pred_check_branch
      %50 = sbr.rel (0) target = $region17
    $region16: #{lstm_cell_step.1} parent=1 // pred_region
      %s52 = ssub.s32 1024, 1024
      %53 = vsyncadd [#allocation9], %s52
      %s54 = sshll.u32 [#allocation8], 4
      %s55 = int_to_ptr.vmem [resolvable:$true] %s54
      %60 = dma.hbm_to_vmem [thread:$0]  %s3, 1024, %s55, [#allocation9], 512, 512, 32
    $region17: #{lstm_cell_step.1} parent=1 // pred_fallthru
      _
    // Predicated region
    $region18: #{lstm_cell_step.1} parent=1 // pred_check
      _
    $region19: #{lstm_cell_step.1} parent=1 // pred_check_branch
      %62 = sbr.rel (0) target = $region21
    $region20: #{lstm_cell_step.1} parent=1 // pred_region
      %s64 = ssub.s32 8192, 8192
      %65 = vsyncadd [#allocation9], %s64
      %s66 = sshll.u32 [#allocation10], 4
      %s67 = int_to_ptr.vmem [resolvable:$true] %s66
      %72 = dma.hbm_to_vmem [thread:$0]  %s4, 8192, %s67, [#allocation9], 512, 512, 32
    $region21: #{lstm_cell_step.1} parent=1 // pred_fallthru
      _
    // Predicated region
    $region22: #{lstm_cell_step.1} parent=1 // pred_check
      _
    $region23: #{lstm_cell_step.1} parent=1 // pred_check_branch
      %74 = sbr.rel (0) target = $region25
    $region24: #{lstm_cell_step.1} parent=1 // pred_region
      %s76 = ssub.s32 64, 64
      %77 = vsyncadd [#allocation12], %s76
      %s79 = sshll.u32 [#allocation11], 4
      %s80 = int_to_ptr.vmem [resolvable:$true] %s79
      %82 = dma.hbm_to_vmem [thread:$0]  %s5, 64, %s80, [#allocation12]
    $region25: #{lstm_cell_step.1} parent=1 // pred_fallthru
      _
    // Predicated region
    $region26: #{lstm_cell_step.1} parent=1 // pred_check
      _
    $region27: #{lstm_cell_step.1} parent=1 // pred_check_branch
      %84 = sbr.rel (0) target = $region29
    $region28: #{lstm_cell_step.1} parent=1 // pred_region
      %85 = dma.done [#allocation3], 128
    $region29: #{lstm_cell_step.1} parent=1 // pred_fallthru
      _
    // Predicated region
    $region30: #{lstm_cell_step.1} parent=1 // pred_check
      _
    $region31: #{lstm_cell_step.1} parent=1 // pred_check_branch
      %87 = sbr.rel (0) target = $region33
    $region32: #{lstm_cell_step.1} parent=1 // pred_region
      %88 = dma.done [#allocation6], 128
    $region33: #{lstm_cell_step.1} parent=1 // pred_fallthru
      _
    // Predicated region
    $region34: #{lstm_cell_step.1} parent=1 // pred_check
      _
    $region35: #{lstm_cell_step.1} parent=1 // pred_check_branch
      %90 = sbr.rel (0) target = $region37
    $region36: #{lstm_cell_step.1} parent=1 // pred_region
      %91 = dma.done [#allocation6], 128
    $region37: #{lstm_cell_step.1} parent=1 // pred_fallthru
      _
    // Predicated region
    $region38: #{lstm_cell_step.1} parent=1 // pred_check
      _
    $region39: #{lstm_cell_step.1} parent=1 // pred_check_branch
      %93 = sbr.rel (0) target = $region41
    $region40: #{lstm_cell_step.1} parent=1 // pred_region
      %94 = dma.done [#allocation9], 1024
    $region41: #{lstm_cell_step.1} parent=1 // pred_fallthru
      _
    // Predicated region
    $region42: #{lstm_cell_step.1} parent=1 // pred_check
      _
    $region43: #{lstm_cell_step.1} parent=1 // pred_check_branch
      %96 = sbr.rel (0) target = $region45
    $region44: #{lstm_cell_step.1} parent=1 // pred_region
      %97 = dma.done [#allocation9], 8192
    $region45: #{lstm_cell_step.1} parent=1 // pred_fallthru
      _
    // Predicated region
    $region46: #{lstm_cell_step.1} parent=1 // pred_check
      _
    $region47: #{lstm_cell_step.1} parent=1 // pred_check_branch
      %99 = sbr.rel (0) target = $region49
    $region48: #{lstm_cell_step.1} parent=1 // pred_region
      %100 = dma.done [#allocation12], 64
    $region49: #{lstm_cell_step.1} parent=1 // pred_fallthru
      _
    %v101 = vld [vmem:[#allocation2] sm:$0xff]
    %v102 = vld [vmem:[#allocation8] sm:$0xff]
    %v103 = vld [vmem:[#allocation8 + $0x8] sm:$0xff]
    %v104 = vld [vmem:[#allocation8 + $0x10] sm:$0xff]
    %v105 = vld [vmem:[#allocation8 + $0x18] sm:$0xff]
    %v106 = vld [vmem:[#allocation8 + $0x20] sm:$0xff]
    %v107 = vld [vmem:[#allocation8 + $0x28] sm:$0xff]
    %v108 = vld [vmem:[#allocation8 + $0x30] sm:$0xff]
    %v109 = vld [vmem:[#allocation8 + $0x38] sm:$0xff]
    %v110 = vld [vmem:[#allocation5] sm:$0xff]
    %v111 = vld [vmem:[#allocation10] sm:$0xff]
    %v112 = vld [vmem:[#allocation10 + $0x8] sm:$0xff]
    %v113 = vld [vmem:[#allocation10 + $0x10] sm:$0xff]
    %v114 = vld [vmem:[#allocation10 + $0x18] sm:$0xff]
    %v115 = vld [vmem:[#allocation10 + $0x20] sm:$0xff]
    %v116 = vld [vmem:[#allocation10 + $0x28] sm:$0xff]
    %v117 = vld [vmem:[#allocation10 + $0x30] sm:$0xff]
    %v118 = vld [vmem:[#allocation10 + $0x38] sm:$0xff]
    %v119 = vld [vmem:[#allocation10 + $0x40] sm:$0xff]
    %v120 = vld [vmem:[#allocation10 + $0x48] sm:$0xff]
    %v121 = vld [vmem:[#allocation10 + $0x50] sm:$0xff]
    %v122 = vld [vmem:[#allocation10 + $0x58] sm:$0xff]
    %v123 = vld [vmem:[#allocation10 + $0x60] sm:$0xff]
    %v124 = vld [vmem:[#allocation10 + $0x68] sm:$0xff]
    %v125 = vld [vmem:[#allocation10 + $0x70] sm:$0xff]
    %v126 = vld [vmem:[#allocation10 + $0x78] sm:$0xff]
    %v127 = vld [vmem:[#allocation10 + $0x80] sm:$0xff]
    %v128 = vld [vmem:[#allocation10 + $0x88] sm:$0xff]
    %v129 = vld [vmem:[#allocation10 + $0x90] sm:$0xff]
    %v130 = vld [vmem:[#allocation10 + $0x98] sm:$0xff]
    %v131 = vld [vmem:[#allocation10 + $0xa0] sm:$0xff]
    %v132 = vld [vmem:[#allocation10 + $0xa8] sm:$0xff]
    %v133 = vld [vmem:[#allocation10 + $0xb0] sm:$0xff]
    %v134 = vld [vmem:[#allocation10 + $0xb8] sm:$0xff]
    %v135 = vld [vmem:[#allocation10 + $0xc0] sm:$0xff]
    %v136 = vld [vmem:[#allocation10 + $0xc8] sm:$0xff]
    %v137 = vld [vmem:[#allocation10 + $0xd0] sm:$0xff]
    %v138 = vld [vmem:[#allocation10 + $0xd8] sm:$0xff]
    %v139 = vld [vmem:[#allocation10 + $0xe0] sm:$0xff]
    %v140 = vld [vmem:[#allocation10 + $0xe8] sm:$0xff]
    %v141 = vld [vmem:[#allocation10 + $0xf0] sm:$0xff]
    %v142 = vld [vmem:[#allocation10 + $0xf8] sm:$0xff]
    %v143 = vld [vmem:[#allocation10 + $0x100] sm:$0xff]
    %v144 = vld [vmem:[#allocation10 + $0x108] sm:$0xff]
    %v145 = vld [vmem:[#allocation10 + $0x110] sm:$0xff]
    %v146 = vld [vmem:[#allocation10 + $0x118] sm:$0xff]
    %v147 = vld [vmem:[#allocation10 + $0x120] sm:$0xff]
    %v148 = vld [vmem:[#allocation10 + $0x128] sm:$0xff]
    %v149 = vld [vmem:[#allocation10 + $0x130] sm:$0xff]
    %v150 = vld [vmem:[#allocation10 + $0x138] sm:$0xff]
    %v151 = vld [vmem:[#allocation10 + $0x140] sm:$0xff]
    %v152 = vld [vmem:[#allocation10 + $0x148] sm:$0xff]
    %v153 = vld [vmem:[#allocation10 + $0x150] sm:$0xff]
    %v154 = vld [vmem:[#allocation10 + $0x158] sm:$0xff]
    %v155 = vld [vmem:[#allocation10 + $0x160] sm:$0xff]
    %v156 = vld [vmem:[#allocation10 + $0x168] sm:$0xff]
    %v157 = vld [vmem:[#allocation10 + $0x170] sm:$0xff]
    %v158 = vld [vmem:[#allocation10 + $0x178] sm:$0xff]
    %v159 = vld [vmem:[#allocation10 + $0x180] sm:$0xff]
    %v160 = vld [vmem:[#allocation10 + $0x188] sm:$0xff]
    %v161 = vld [vmem:[#allocation10 + $0x190] sm:$0xff]
    %v162 = vld [vmem:[#allocation10 + $0x198] sm:$0xff]
    %v163 = vld [vmem:[#allocation10 + $0x1a0] sm:$0xff]
    %v164 = vld [vmem:[#allocation10 + $0x1a8] sm:$0xff]
    %v165 = vld [vmem:[#allocation10 + $0x1b0] sm:$0xff]
    %v166 = vld [vmem:[#allocation10 + $0x1b8] sm:$0xff]
    %v167 = vld [vmem:[#allocation10 + $0x1c0] sm:$0xff]
    %v168 = vld [vmem:[#allocation10 + $0x1c8] sm:$0xff]
    %v169 = vld [vmem:[#allocation10 + $0x1d0] sm:$0xff]
    %v170 = vld [vmem:[#allocation10 + $0x1d8] sm:$0xff]
    %v171 = vld [vmem:[#allocation10 + $0x1e0] sm:$0xff]
    %v172 = vld [vmem:[#allocation10 + $0x1e8] sm:$0xff]
    %v173 = vld [vmem:[#allocation10 + $0x1f0] sm:$0xff]
    %v174 = vld [vmem:[#allocation10 + $0x1f8] sm:$0xff]
    %175 = vmatprep.subr.mxu0 %v112
    %176 = vmatpush1.msra.mxu0 %v111
    %177 = vmatprep.subr.mxu0 %v116
    %178 = vmatpush1.msra.mxu0 %v115
    %179 = vmatprep.subr.mxu0 %v120
    %180 = vmatpush1.msra.mxu0 %v119
    %181 = vmatprep.subr.mxu0 %v124
    %182 = vmatpush1.msra.mxu0 %v123
    %183 = vmatprep.subr.mxu0 %v128
    %184 = vmatpush1.msra.mxu0 %v127
    %185 = vmatprep.subr.mxu0 %v132
    %186 = vmatpush1.msra.mxu0 %v131
    %187 = vmatprep.subr.mxu0 %v136
    %188 = vmatpush1.msra.mxu0 %v135
    %189 = vmatprep.subr.mxu0 %v140
    %190 = vmatpush1.msra.mxu0 %v139
    %191 = vmatprep.subr.mxu0 %v144
    %192 = vmatpush1.msra.mxu0 %v143
    %193 = vmatprep.subr.mxu0 %v148
    %194 = vmatpush1.msra.mxu0 %v147
    %195 = vmatprep.subr.mxu0 %v152
    %196 = vmatpush1.msra.mxu0 %v151
    %197 = vmatprep.subr.mxu0 %v156
    %198 = vmatpush1.msra.mxu0 %v155
    %199 = vmatprep.subr.mxu0 %v160
    %200 = vmatpush1.msra.mxu0 %v159
    %201 = vmatprep.subr.mxu0 %v164
    %202 = vmatpush1.msra.mxu0 %v163
    %203 = vmatprep.subr.mxu0 %v168
    %204 = vmatpush1.msra.mxu0 %v167
    %205 = vmatprep.subr.mxu0 %v172
    %206 = vmatpush1.msra.mxu0 %v171
    %207 = vmatprep.subr.mxu0 0.0
    %208 = vmatpush1.msra.mxu0 0.0
    %209 = vmatprep.subr.mxu0 0.0
    %210 = vmatpush1.msra.mxu0 0.0
    %211 = vmatprep.subr.mxu0 0.0
    %212 = vmatpush1.msra.mxu0 0.0
    %213 = vmatprep.subr.mxu0 0.0
    %214 = vmatpush1.msra.mxu0 0.0
    %215 = vmatprep.subr.mxu0 0.0
    %216 = vmatpush1.msra.mxu0 0.0
    %217 = vmatprep.subr.mxu0 0.0
    %218 = vmatpush1.msra.mxu0 0.0
    %219 = vmatprep.subr.mxu0 0.0
    %220 = vmatpush1.msra.mxu0 0.0
    %221 = vmatprep.subr.mxu0 0.0
    %222 = vmatpush1.msra.mxu0 0.0
    %223 = vmatprep.subr.mxu0 0.0
    %224 = vmatpush1.msra.mxu0 0.0
    %225 = vmatprep.subr.mxu0 0.0
    %226 = vmatpush1.msra.mxu0 0.0
    %227 = vmatprep.subr.mxu0 0.0
    %228 = vmatpush1.msra.mxu0 0.0
    %229 = vmatprep.subr.mxu0 0.0
    %230 = vmatpush1.msra.mxu0 0.0
    %231 = vmatprep.subr.mxu0 0.0
    %232 = vmatpush1.msra.mxu0 0.0
    %233 = vmatprep.subr.mxu0 0.0
    %234 = vmatpush1.msra.mxu0 0.0
    %235 = vmatprep.subr.mxu0 0.0
    %236 = vmatpush1.msra.mxu0 0.0
    %237 = vmatprep.subr.mxu0 0.0
    %238 = vmatpush1.msra.mxu0 0.0
    %239 = vmatprep.mubr.f32.mxu0 0.0
    %240 = vmatmul.mubr.f32.gmra.mrb[0].mxu0 %v110
    %v241 = vpop.f32.mrb[0].mxu0
    %v242 = vadd.f32 0.0, %v241
    %v243 = vpop.f32.mrb[0].mxu0
    %v244 = vadd.f32 0.0, %v243
    %245 = vdwg.mxu0
    %246 = vmatprep.subr.mxu0 %v114
    %247 = vmatpush1.msra.mxu0 %v113
    %248 = vmatprep.subr.mxu0 %v118
    %249 = vmatpush1.msra.mxu0 %v117
    %250 = vmatprep.subr.mxu0 %v122
    %251 = vmatpush1.msra.mxu0 %v121
    %252 = vmatprep.subr.mxu0 %v126
    %253 = vmatpush1.msra.mxu0 %v125
    %254 = vmatprep.subr.mxu0 %v130
    %255 = vmatpush1.msra.mxu0 %v129
    %256 = vmatprep.subr.mxu0 %v134
    %257 = vmatpush1.msra.mxu0 %v133
    %258 = vmatprep.subr.mxu0 %v138
    %259 = vmatpush1.msra.mxu0 %v137
    %260 = vmatprep.subr.mxu0 %v142
    %261 = vmatpush1.msra.mxu0 %v141
    %262 = vmatprep.subr.mxu0 %v146
    %263 = vmatpush1.msra.mxu0 %v145
    %264 = vmatprep.subr.mxu0 %v150
    %265 = vmatpush1.msra.mxu0 %v149
    %266 = vmatprep.subr.mxu0 %v154
    %267 = vmatpush1.msra.mxu0 %v153
    %268 = vmatprep.subr.mxu0 %v158
    %269 = vmatpush1.msra.mxu0 %v157
    %270 = vmatprep.subr.mxu0 %v162
    %271 = vmatpush1.msra.mxu0 %v161
    %272 = vmatprep.subr.mxu0 %v166
    %273 = vmatpush1.msra.mxu0 %v165
    %274 = vmatprep.subr.mxu0 %v170
    %275 = vmatpush1.msra.mxu0 %v169
    %276 = vmatprep.subr.mxu0 %v174
    %277 = vmatpush1.msra.mxu0 %v173
    %278 = vmatprep.subr.mxu0 0.0
    %279 = vmatpush1.msra.mxu0 0.0
    %280 = vmatprep.subr.mxu0 0.0
    %281 = vmatpush1.msra.mxu0 0.0
    %282 = vmatprep.subr.mxu0 0.0
    %283 = vmatpush1.msra.mxu0 0.0
    %284 = vmatprep.subr.mxu0 0.0
    %285 = vmatpush1.msra.mxu0 0.0
    %286 = vmatprep.subr.mxu0 0.0
    %287 = vmatpush1.msra.mxu0 0.0
    %288 = vmatprep.subr.mxu0 0.0
    %289 = vmatpush1.msra.mxu0 0.0
    %290 = vmatprep.subr.mxu0 0.0
    %291 = vmatpush1.msra.mxu0 0.0
    %292 = vmatprep.subr.mxu0 0.0
    %293 = vmatpush1.msra.mxu0 0.0
    %294 = vmatprep.subr.mxu0 0.0
    %295 = vmatpush1.msra.mxu0 0.0
    %296 = vmatprep.subr.mxu0 0.0
    %297 = vmatpush1.msra.mxu0 0.0
    %298 = vmatprep.subr.mxu0 0.0
    %299 = vmatpush1.msra.mxu0 0.0
    %300 = vmatprep.subr.mxu0 0.0
    %301 = vmatpush1.msra.mxu0 0.0
    %302 = vmatprep.subr.mxu0 0.0
    %303 = vmatpush1.msra.mxu0 0.0
    %304 = vmatprep.subr.mxu0 0.0
    %305 = vmatpush1.msra.mxu0 0.0
    %306 = vmatprep.subr.mxu0 0.0
    %307 = vmatpush1.msra.mxu0 0.0
    %308 = vmatprep.subr.mxu0 0.0
    %309 = vmatpush1.msra.mxu0 0.0
    %310 = vmatprep.mubr.f32.mxu0 0.0
    %311 = vmatmul.mubr.f32.gmra.mrb[0].mxu0 %v110
    %v312 = vpop.f32.mrb[0].mxu0
    %v313 = vadd.f32 0.0, %v312
    %v314 = vpop.f32.mrb[0].mxu0
    %v315 = vadd.f32 0.0, %v314
    %316 = vdwg.mxu0
    %vm317 = vcmask 130048
    %v319 = vsel %vm317, %v101, 0
    %321 = vmatprep.subr.mxu0 %v103
    %322 = vmatpush1.msra.mxu0 %v102
    %323 = vmatprep.subr.mxu0 %v107
    %324 = vmatpush1.msra.mxu0 %v106
    %325 = vmatprep.subr.mxu0 0.0
    %326 = vmatpush1.msra.mxu0 0.0
    %327 = vmatprep.subr.mxu0 0.0
    %328 = vmatpush1.msra.mxu0 0.0
    %329 = vmatprep.subr.mxu0 0.0
    %330 = vmatpush1.msra.mxu0 0.0
    %331 = vmatprep.subr.mxu0 0.0
    %332 = vmatpush1.msra.mxu0 0.0
    %333 = vmatprep.subr.mxu0 0.0
    %334 = vmatpush1.msra.mxu0 0.0
    %335 = vmatprep.subr.mxu0 0.0
    %336 = vmatpush1.msra.mxu0 0.0
    %337 = vmatprep.subr.mxu0 0.0
    %338 = vmatpush1.msra.mxu0 0.0
    %339 = vmatprep.subr.mxu0 0.0
    %340 = vmatpush1.msra.mxu0 0.0
    %341 = vmatprep.subr.mxu0 0.0
    %342 = vmatpush1.msra.mxu0 0.0
    %343 = vmatprep.subr.mxu0 0.0
    %344 = vmatpush1.msra.mxu0 0.0
    %345 = vmatprep.subr.mxu0 0.0
    %346 = vmatpush1.msra.mxu0 0.0
    %347 = vmatprep.subr.mxu0 0.0
    %348 = vmatpush1.msra.mxu0 0.0
    %349 = vmatprep.subr.mxu0 0.0
    %350 = vmatpush1.msra.mxu0 0.0
    %351 = vmatprep.subr.mxu0 0.0
    %352 = vmatpush1.msra.mxu0 0.0
    %353 = vmatprep.subr.mxu0 0.0
    %354 = vmatpush1.msra.mxu0 0.0
    %355 = vmatprep.subr.mxu0 0.0
    %356 = vmatpush1.msra.mxu0 0.0
    %357 = vmatprep.subr.mxu0 0.0
    %358 = vmatpush1.msra.mxu0 0.0
    %359 = vmatprep.subr.mxu0 0.0
    %360 = vmatpush1.msra.mxu0 0.0
    %361 = vmatprep.subr.mxu0 0.0
    %362 = vmatpush1.msra.mxu0 0.0
    %363 = vmatprep.subr.mxu0 0.0
    %364 = vmatpush1.msra.mxu0 0.0
    %365 = vmatprep.subr.mxu0 0.0
    %366 = vmatpush1.msra.mxu0 0.0
    %367 = vmatprep.subr.mxu0 0.0
    %368 = vmatpush1.msra.mxu0 0.0
    %369 = vmatprep.subr.mxu0 0.0
    %370 = vmatpush1.msra.mxu0 0.0
    %371 = vmatprep.subr.mxu0 0.0
    %372 = vmatpush1.msra.mxu0 0.0
    %373 = vmatprep.subr.mxu0 0.0
    %374 = vmatpush1.msra.mxu0 0.0
    %375 = vmatprep.subr.mxu0 0.0
    %376 = vmatpush1.msra.mxu0 0.0
    %377 = vmatprep.subr.mxu0 0.0
    %378 = vmatpush1.msra.mxu0 0.0
    %379 = vmatprep.subr.mxu0 0.0
    %380 = vmatpush1.msra.mxu0 0.0
    %381 = vmatprep.subr.mxu0 0.0
    %382 = vmatpush1.msra.mxu0 0.0
    %383 = vmatprep.subr.mxu0 0.0
    %384 = vmatpush1.msra.mxu0 0.0
    %385 = vmatprep.mubr.f32.mxu0 0.0
    %386 = vmatmul.mubr.f32.gmra.mrb[0].mxu0 %v319
    %v387 = vpop.f32.mrb[0].mxu0
    %v388 = vadd.f32 %v242, %v387
    %v389 = vpop.f32.mrb[0].mxu0
    %v390 = vadd.f32 %v244, %v389
    %391 = vdwg.mxu0
    %392 = vmatprep.subr.mxu0 %v105
    %393 = vmatpush1.msra.mxu0 %v104
    %394 = vmatprep.subr.mxu0 %v109
    %395 = vmatpush1.msra.mxu0 %v108
    %396 = vmatprep.subr.mxu0 0.0
    %397 = vmatpush1.msra.mxu0 0.0
    %398 = vmatprep.subr.mxu0 0.0
    %399 = vmatpush1.msra.mxu0 0.0
    %400 = vmatprep.subr.mxu0 0.0
    %401 = vmatpush1.msra.mxu0 0.0
    %402 = vmatprep.subr.mxu0 0.0
    %403 = vmatpush1.msra.mxu0 0.0
    %404 = vmatprep.subr.mxu0 0.0
    %405 = vmatpush1.msra.mxu0 0.0
    %406 = vmatprep.subr.mxu0 0.0
    %407 = vmatpush1.msra.mxu0 0.0
    %408 = vmatprep.subr.mxu0 0.0
    %409 = vmatpush1.msra.mxu0 0.0
    %410 = vmatprep.subr.mxu0 0.0
    %411 = vmatpush1.msra.mxu0 0.0
    %412 = vmatprep.subr.mxu0 0.0
    %413 = vmatpush1.msra.mxu0 0.0
    %414 = vmatprep.subr.mxu0 0.0
    %415 = vmatpush1.msra.mxu0 0.0
    %416 = vmatprep.subr.mxu0 0.0
    %417 = vmatpush1.msra.mxu0 0.0
    %418 = vmatprep.subr.mxu0 0.0
    %419 = vmatpush1.msra.mxu0 0.0
    %420 = vmatprep.subr.mxu0 0.0
    %421 = vmatpush1.msra.mxu0 0.0
    %422 = vmatprep.subr.mxu0 0.0
    %423 = vmatpush1.msra.mxu0 0.0
    %424 = vmatprep.subr.mxu0 0.0
    %425 = vmatpush1.msra.mxu0 0.0
    %426 = vmatprep.subr.mxu0 0.0
    %427 = vmatpush1.msra.mxu0 0.0
    %428 = vmatprep.subr.mxu0 0.0
    %429 = vmatpush1.msra.mxu0 0.0
    %430 = vmatprep.subr.mxu0 0.0
    %431 = vmatpush1.msra.mxu0 0.0
    %432 = vmatprep.subr.mxu0 0.0
    %433 = vmatpush1.msra.mxu0 0.0
    %434 = vmatprep.subr.mxu0 0.0
    %435 = vmatpush1.msra.mxu0 0.0
    %436 = vmatprep.subr.mxu0 0.0
    %437 = vmatpush1.msra.mxu0 0.0
    %438 = vmatprep.subr.mxu0 0.0
    %439 = vmatpush1.msra.mxu0 0.0
    %440 = vmatprep.subr.mxu0 0.0
    %441 = vmatpush1.msra.mxu0 0.0
    %442 = vmatprep.subr.mxu0 0.0
    %443 = vmatpush1.msra.mxu0 0.0
    %444 = vmatprep.subr.mxu0 0.0
    %445 = vmatpush1.msra.mxu0 0.0
    %446 = vmatprep.subr.mxu0 0.0
    %447 = vmatpush1.msra.mxu0 0.0
    %448 = vmatprep.subr.mxu0 0.0
    %449 = vmatpush1.msra.mxu0 0.0
    %450 = vmatprep.subr.mxu0 0.0
    %451 = vmatpush1.msra.mxu0 0.0
    %452 = vmatprep.subr.mxu0 0.0
    %453 = vmatpush1.msra.mxu0 0.0
    %454 = vmatprep.subr.mxu0 0.0
    %455 = vmatpush1.msra.mxu0 0.0
    %456 = vmatprep.mubr.f32.mxu0 0.0
    %457 = vmatmul.mubr.f32.gmra.mrb[0].mxu0 %v319
    %v458 = vpop.f32.mrb[0].mxu0
    %v459 = vadd.f32 %v313, %v458
    %v460 = vpop.f32.mrb[0].mxu0
    %v461 = vadd.f32 %v315, %v460
    %462 = vdwg.mxu0
    %v463 = vld [vmem:[#allocation11] sm:$0xf]
    %v465 = vlaneseq
    %v466 = vshrl.u32 %v465, 7
    %v467 = vsub.s32 0, %v466
    %v468 = vrot.slane %v463, %v467
    %v469 = vlaneseq
    %v470 = vshrl.u32 %v469, 7
    %v471 = vsub.s32 1, %v470
    %v472 = vrot.slane %v463, %v471
    %v473 = vlaneseq
    %v474 = vshrl.u32 %v473, 7
    %v475 = vsub.s32 2, %v474
    %v476 = vrot.slane %v463, %v475
    %v477 = vlaneseq
    %v478 = vshrl.u32 %v477, 7
    %v479 = vsub.s32 3, %v478
    %v480 = vrot.slane %v463, %v479
    %v485 = vadd.f32 %v388, %v468
    %v486 = vadd.f32 %v390, %v472
    %v487 = vadd.f32 %v459, %v476
    %v488 = vadd.f32 %v461, %v480
    %v489 = vmul.f32 %v485, 0.5
    %v490 = vtanh.pop %v489
    %v491 = vmul.f32 %v490, 0.5
    %v492 = vadd.f32 %v491, 0.5
    %v493 = vtanh.pop %v487
    %v494 = vmul.f32 %v492, %v493
    %v495 = vmul.f32 %v486, 0.5
    %v496 = vtanh.pop %v495
    %v497 = vmul.f32 %v496, 0.5
    %v498 = vadd.f32 %v497, 0.5
    %v499 = vld [vmem:[#allocation7] sm:$0xff]
    %v500 = vmul.f32 %v498, %v499
    %v501 = vadd.f32 %v500, %v494
    %502 = vst [vmem:[#allocation14] sm:$0xff] %v501
    %v503 = vmul.f32 %v488, 0.5
    %v504 = vtanh.pop %v503
    %v505 = vmul.f32 %v504, 0.5
    %v506 = vadd.f32 %v505, 0.5
    %v507 = vtanh.pop %v501
    %v508 = vmul.f32 %v506, %v507
    %509 = vst [vmem:[#allocation13] sm:$0xff] %v508
    // Predicated region
    $region50: #{lstm_cell_step.1} parent=1 // pred_check
      _
    $region51: #{lstm_cell_step.1} parent=1 // pred_check_branch
      %511 = sbr.rel (0) target = $region53
    $region52: #{lstm_cell_step.1} parent=1 // pred_region
      %s513 = ssub.s32 128, 128
      %514 = vsyncadd [#allocation4], %s513
      %s516 = sshll.u32 [#allocation13], 4
      %s517 = int_to_ptr.vmem [resolvable:$true] %s516
      %519 = dma.vmem_to_hbm [thread:$0]  %s517, 128, %s6, [#allocation4]
    $region53: #{lstm_cell_step.1} parent=1 // pred_fallthru
      _
    // Predicated region
    $region54: #{lstm_cell_step.1} parent=1 // pred_check
      _
    $region55: #{lstm_cell_step.1} parent=1 // pred_check_branch
      %521 = sbr.rel (0) target = $region57
    $region56: #{lstm_cell_step.1} parent=1 // pred_region
      %s523 = ssub.s32 128, 128
      %524 = vsyncadd [#allocation15], %s523
      %s526 = sshll.u32 [#allocation14], 4
      %s527 = int_to_ptr.vmem [resolvable:$true] %s526
      %529 = dma.vmem_to_hbm [thread:$0]  %s527, 128, %s7, [#allocation15]
    $region57: #{lstm_cell_step.1} parent=1 // pred_fallthru
      _
    // Predicated region
    $region58: #{lstm_cell_step.1} parent=1 // pred_check
      _
    $region59: #{lstm_cell_step.1} parent=1 // pred_check_branch
      %531 = sbr.rel (0) target = $region61
    $region60: #{lstm_cell_step.1} parent=1 // pred_region
      %532 = dma.done [#allocation4], 128
    $region61: #{lstm_cell_step.1} parent=1 // pred_fallthru
      _
    // Predicated region
    $region62: #{lstm_cell_step.1} parent=1 // pred_check
      _
    $region63: #{lstm_cell_step.1} parent=1 // pred_check_branch
      %534 = sbr.rel (0) target = $region65
    $region64: #{lstm_cell_step.1} parent=1 // pred_region
      %535 = dma.done [#allocation15], 128
    $region65: #{lstm_cell_step.1} parent=1 // pred_fallthru
      _
    %536 = vsyncpa [#allocation3], 1
    %537 = vsyncpa [#allocation6], 1
    %538 = vsyncpa [#allocation9], 1
    %539 = vsyncpa [#allocation12], 1
    %540 = vsyncpa [#allocation4], 1
    %541 = vsyncpa [#allocation15], 1

</llo_original>
